<compile_context>
chip_gen: v7x
topology: tpu7x:2x2x1
jax: 0.10.0
libtpu: 0.0.40
codegen_flags: <defaults>
</compile_context>

<pallas_src>
import math

import jax
import jax.numpy as jnp
from jax.experimental import pallas as pl
from jax.experimental.pallas import tpu as pltpu


def _fmnet_kernel(x_ref, o_ref):
    # x_ref: (bt, up_w, up_h)  pixel-shuffled last-64-channel features
    # o_ref: (bt, TW, H)       one W-tile of the output map (channel squeezed)
    bt, up_w, up_h = x_ref.shape
    _, TW, H = o_ref.shape
    t = pl.program_id(1)

    if TW <= up_w:
        # Wrapper guarantees TW | up_w here, so a W-tile is either fully inside
        # the active 8h region or fully in the zero-pad region.
        r0 = pl.multiple_of(t * TW, TW)

        @pl.when(r0 < up_w)                    # fully-active tile
        def _():
            x = x_ref[...] if TW == up_w else x_ref[:, pl.ds(r0, TW), :]
            s = 1.0 / (1.0 + jnp.exp(-x))      # exact sigmoid (EUP+VALU slack)
            o_ref[:, :, :up_h] = s
            if H > up_h:                       # pad columns == sigmoid(-inf)
                o_ref[:, :, up_h:] = jnp.zeros((bt, TW, H - up_h), o_ref.dtype)

        @pl.when(r0 >= up_w)                   # fully-pad tile
        def _():
            o_ref[...] = jnp.zeros_like(o_ref)
    else:
        # Single W tile spanning both the active region and the pad rows
        # (TW == W > up_w): everything is static, use static sub-slice stores.
        s = 1.0 / (1.0 + jnp.exp(-x_ref[...]))
        o_ref[:, :up_w, :up_h] = s
        if H > up_h:
            o_ref[:, :up_w, up_h:] = jnp.zeros((bt, up_w, H - up_h), o_ref.dtype)
        o_ref[:, up_w:, :] = jnp.zeros((bt, TW - up_w, H), o_ref.dtype)


def _vmem_capacity_bytes():
    try:
        info = pltpu.get_tpu_info()
        for name in ("vmem_capacity_bytes", "vmem_size_bytes", "vmem_bytes"):
            cap = getattr(info, name, None)
            if cap:
                return int(cap)
    except Exception:
        pass
    return 64 * 1024 * 1024  # conservative: v7x physical VMEM


def _choose_tiles(B, W, H, up_w, up_h, budget_bytes):
    """Pick (batch fold bt, W tile TW).

    W-tiles are either fully inside the active 8h region or fully pad
    (TW | up_w), unless a single tile spans all of W.  Prefers the largest
    blocks that fit the VMEM budget while keeping >= 2 grid steps whenever
    possible (so both v7x TensorCores get work, including B == 1).
    """
    bytes_per = 4  # float32

    def step_bytes(bt, tw):
        # input block + output block, each double-buffered by the pipeline
        return 2 * bt * up_w * up_h * bytes_per + 2 * bt * tw * H * bytes_per

    cands = [W]
    t = W if W == up_w else math.gcd(W, up_w)
    while t >= 8 and t % 8 == 0:
        if W % t == 0 and up_w % t == 0 and t not in cands:
            cands.append(t)
        t //= 2
    cands.sort(reverse=True)

    bt_cands = [d for d in range(B, 0, -1) if B % d == 0]
    want_multi = B > 1 or len(cands) > 1

    for tw in cands:
        for bt in bt_cands:
            if step_bytes(bt, tw) > budget_bytes:
                continue
            if want_multi and (B // bt) * (W // tw) < 2:
                continue
            return bt, tw
    return 1, cands[-1]


def fmnet_forward(FV, batch_size, W, H):
    """FV: (B, C, h, w) NCHW float32 with C == 128. Returns (B, 1, W, H)."""
    B, C, h, w = FV.shape
    assert B == batch_size
    assert C == 128, "FMNet expects 128 input channels (uses channels 64:128)"
    up_w, up_h = 8 * h, 8 * w
    assert W >= up_w and H >= up_h

    last64 = FV[:, 64:128, :, :].astype(jnp.float32)       # (B, 64, h, w)

    # Pixel-shuffle glue (pure layout plumbing, no arithmetic):
    #   up[b, 8i+p, 8j+q] = last64[b, 8p+q, i, j]
    # allow_input_fusion lets XLA fuse this slice/reshape/transpose chain into
    # the kernel's input instead of writing `up` back to HBM.
    # TODO(synk): if HLO shows `up` materialized in HBM, feed FV directly via a
    # channel-block BlockSpec and do the 8x shuffle in-kernel on the XLU.
    up = (
        last64.reshape(B, 8, 8, h, w)
        .transpose(0, 3, 1, 4, 2)
        .reshape(B, up_w, up_h)
    )

    vmem_cap = _vmem_capacity_bytes()
    vmem_limit = int(min(vmem_cap * 3 // 4, 100 * 1024 * 1024))
    bt, TW = _choose_tiles(B, W, H, up_w, up_h, vmem_limit * 7 // 8)

    # TODO(synk): emit bf16 output (halves the dominant HBM writeback) if the
    # downstream consumer tolerates it; kept f32 to match the PyTorch module.
    out = pl.pallas_call(
        _fmnet_kernel,
        out_shape=jax.ShapeDtypeStruct((B, 1, W, H), jnp.float32),
        grid=(B // bt, W // TW),
        in_specs=[pl.BlockSpec((bt, up_w, up_h), lambda b, t: (b, 0, 0))],
        out_specs=pl.BlockSpec((bt, pl.Squeezed(), TW, H),
                               lambda b, t: (b, 0, t, 0)),
        compiler_params=pltpu.CompilerParams(
            dimension_semantics=("parallel", "parallel"),
            allow_input_fusion=[True],
            vmem_limit_bytes=vmem_limit,
        ),
    )(up)
    return out


def fmnet_reference(FV, batch_size, W, H):
    """Pure-JAX transcription of the PyTorch forward (for verification)."""
    B, C, h, w = FV.shape
    feat = FV[:, 64:, :, :]
    like = jnp.full((B, W, H), -jnp.inf, dtype=jnp.float32)
    for i in range(h):
        for j in range(w):
            bl = feat[:, :, i, j].reshape(-1, 8, 8)
            like = like.at[:, i * 8 : i * 8 + 8, j * 8 : j * 8 + 8].set(bl)
    return jax.nn.sigmoid(like)[:, None, :, :]


if __name__ == "__main__":
    key = jax.random.PRNGKey(0)
    B, C, h, w = 2, 128, 16, 16        # FMNet has no weights; 128 = 64 + 64 channels
    W, H = 256, 256                    # > 8h, 8w -> exercises the zero-padded region;
                                       # H multiple of 128 -> lane-dense stores

    FV = jax.random.normal(key, (B, C, h, w), dtype=jnp.float32)

    fmnet = jax.jit(fmnet_forward, static_argnums=(1, 2, 3))
    out = jax.block_until_ready(fmnet(FV, B, W, H))
    ref = fmnet_reference(FV, B, W, H)

    assert out.shape == (B, 1, W, H)
    # Exact sigmoid in the kernel -> tight tolerance (placement errors would be
    # O(0.5), so this also catches any shuffle/tiling bug).
    assert jnp.allclose(out, ref, atol=1e-5, rtol=0), "mismatch vs reference"

    print("KERNEL_OK")
</pallas_src>

<mosaic_0001>
module attributes {stable_mosaic.version = 11 : i64} {
  func.func @_fmnet_kernel(%arg0: i32, %arg1: i32, %arg2: memref<1x128x128xf32, #tpu.memory_space<vmem>>, %arg3: memref<1x1x256x256xf32, #tpu.memory_space<vmem>>) attributes {dimension_semantics = [#tpu.dimension_semantics<parallel>, #tpu.dimension_semantics<parallel>], iteration_bounds = array<i64: 2, 1>, scalar_prefetch = 0 : i64, scratch_operands = 0 : i64, tpu.core_type = #tpu.core_type<tc>, window_params = [{transform_indices = @transform_0, window_bounds = array<i64: 1, 128, 128>}, {transform_indices = @transform_1, window_bounds = array<i64: 1, 1, 256, 256>}]} {
    %c0 = arith.constant 0 : index
    %c0_0 = arith.constant 0 : index
    %c0_1 = arith.constant 0 : index
    %0 = vector.load %arg2[%c0, %c0_0, %c0_1] : memref<1x128x128xf32, #tpu.memory_space<vmem>>, vector<1x128x128xf32>
    %cst = arith.constant 0.000000e+00 : f32
    %1 = vector.broadcast %cst : f32 to vector<1x128x128xf32>
    %2 = arith.subf %1, %0 : vector<1x128x128xf32>
    %3 = math.exp %2 : vector<1x128x128xf32>
    %cst_2 = arith.constant 1.000000e+00 : f32
    %4 = vector.broadcast %cst_2 : f32 to vector<1x128x128xf32>
    %5 = arith.addf %4, %3 : vector<1x128x128xf32>
    %cst_3 = arith.constant 1.000000e+00 : f32
    %6 = vector.broadcast %cst_3 : f32 to vector<1x128x128xf32>
    %7 = arith.divf %6, %5 : vector<1x128x128xf32>
    %c0_4 = arith.constant 0 : index
    %c0_5 = arith.constant 0 : index
    %c0_6 = arith.constant 0 : index
    %c0_7 = arith.constant 0 : index
    %8 = vector.load %arg3[%c0_4, %c0_5, %c0_6, %c0_7] : memref<1x1x256x256xf32, #tpu.memory_space<vmem>>, vector<1x1x128x128xf32>
    %9 = vector.shape_cast %8 : vector<1x1x128x128xf32> to vector<1x128x128xf32>
    %10 = vector.shape_cast %7 : vector<1x128x128xf32> to vector<1x1x128x128xf32>
    tpu.vector_store %arg3[%c0_4, %c0_5, %c0_6, %c0_7], %10 {strides = array<i32>} : memref<1x1x256x256xf32, #tpu.memory_space<vmem>>, vector<1x1x128x128xf32>,
    %cst_8 = arith.constant 0.000000e+00 : f32
    %11 = vector.broadcast %cst_8 : f32 to vector<1x128x128xf32>
    %c0_9 = arith.constant 0 : index
    %c0_10 = arith.constant 0 : index
    %c0_11 = arith.constant 0 : index
    %c128 = arith.constant 128 : index
    %12 = vector.load %arg3[%c0_9, %c0_10, %c0_11, %c128] : memref<1x1x256x256xf32, #tpu.memory_space<vmem>>, vector<1x1x128x128xf32>
    %13 = vector.shape_cast %12 : vector<1x1x128x128xf32> to vector<1x128x128xf32>
    %14 = vector.shape_cast %11 : vector<1x128x128xf32> to vector<1x1x128x128xf32>
    tpu.vector_store %arg3[%c0_9, %c0_10, %c0_11, %c128], %14 {strides = array<i32>} : memref<1x1x256x256xf32, #tpu.memory_space<vmem>>, vector<1x1x128x128xf32>,
    %cst_12 = arith.constant 0.000000e+00 : f32
    %15 = vector.broadcast %cst_12 : f32 to vector<1x128x256xf32>
    %c0_13 = arith.constant 0 : index
    %c0_14 = arith.constant 0 : index
    %c128_15 = arith.constant 128 : index
    %c0_16 = arith.constant 0 : index
    %16 = vector.load %arg3[%c0_13, %c0_14, %c128_15, %c0_16] : memref<1x1x256x256xf32, #tpu.memory_space<vmem>>, vector<1x1x128x256xf32>
    %17 = vector.shape_cast %16 : vector<1x1x128x256xf32> to vector<1x128x256xf32>
    %18 = vector.shape_cast %15 : vector<1x128x256xf32> to vector<1x1x128x256xf32>
    tpu.vector_store %arg3[%c0_13, %c0_14, %c128_15, %c0_16], %18 {strides = array<i32>} : memref<1x1x256x256xf32, #tpu.memory_space<vmem>>, vector<1x1x128x256xf32>,
    return
  }
  func.func @transform_0(%arg0: i32, %arg1: i32) -> (i32, i32, i32) {
    %c0_i32 = arith.constant 0 : i32
    %c0_i32_0 = arith.constant 0 : i32
    %c0_i32_1 = arith.constant 0 : i32
    return %arg0, %c0_i32, %c0_i32_0 : i32, i32, i32
  }
  func.func @transform_1(%arg0: i32, %arg1: i32) -> (i32, i32, i32, i32) {
    %c0_i32 = arith.constant 0 : i32
    %c0_i32_0 = arith.constant 0 : i32
    %c0_i32_1 = arith.constant 0 : i32
    return %arg0, %c0_i32, %arg1, %c0_i32_0 : i32, i32, i32, i32
  }
}

</mosaic_0001>

<llo_original>
// kernel: fmnet_forward.1
$region0: #{fmnet_forward.1}
  #allocation0 [shape = 'u32[]', space=smem, size = 0x4, offset = 0x4, fixed_abs, tag = 'smem constant byte address 0x4 - core index']
  #allocation1 [shape = 'u32[144,128]{1,0:T(1,128)}', space=vmem, size = 0x12000, scoped, tag = 'internal scratch']
  %s0 = inlined_call_operand.vmem [shape: f32[2,128,128], index: 0, kind: input, shape index: {}]
  %s1 = inlined_call_operand.hbm [shape: f32[2,1,256,256], index: 1, kind: output, shape index: {}]
  %s2 = sld [smem:[#allocation0]]
  $region37: #{fmnet_forward.1} parent=0
    _
  %s4 = ssub.s32 1, %s2
  %s5 = scalar_select 0, %s4, %s2
  $region1: #{fmnet_forward.1} parent=0
    #allocation2 [shape = 'u8[524288]{0}', space=vmem, size = 0x80000, scoped, tag = 'output window, operand 0']
    #allocation3 [shape = 's32[2]{0}', space=sflag, size = 0x8, scoped, tag = 'scoped memory for fmnet_forward.1']
    %6 = vsyncpa [#allocation3], 0
    %s7 = scalar_lea.sflag [#allocation3], 1
    %8 = vsyncpa %s7, 0
    loop: start=0, step=1, limit=4
    $region2: #{fmnet_forward.1} parent=1 // loop_pre_header
      _
    $region3: #{fmnet_forward.1} parent=1 // loop_header
      %s10 = sphi 0, %s14
      %p11 = scmp.ge.s32.totalorder %s10, 4
      %s17 = sphi 0, %s29
      %s18 = sphi 0, %s25
      %s19 = sphi 0, %s17
      %s20 = sphi 0, %s18
      %s21 = sphi 0, %s19
      %s22 = sphi 0, %s20
      %s32 = sphi 0, %s34
      %s35 = sphi 0, %s32
      %s36 = sphi 0, %s35
      %s52 = sphi 0, %s36
      %s60 = sphi 0, %s62
      %s63 = sphi 0, %s60
      %s64 = sphi 0, %s63
      %s80 = sphi 0, %s64
    $region4: #{fmnet_forward.1} parent=1 // loop_header_branch
      %13 = sbr.rel (%p11) target = $region8
    $region5: #{fmnet_forward.1} parent=1 // loop_body
      %s15 = ssub.s32 %s10, 1
      %s16 = ssub.s32 %s10, 2
      %s23 = sadd.s32 1, %s18
      %p24 = scmp.ge.s32.totalorder %s23, 1
      %s25 = scalar_select %p24, 0, %s23
      %s26 = sadd.s32 1, %s17
      %s27 = scalar_select %p24, %s26, %s17
      %p28 = scmp.ge.s32.totalorder %s27, 2
      %s29 = scalar_select %p28, 0, %s27
      %s30 = ssub.s32 %s17, %s29
      %p31 = scmp.eq.s32.totalorder %s30, 0
      %s33 = sadd.s32 %s32, 1
      %s34 = scalar_select %p31, %s32, %s33
      %p37 = pneg %p31
      %p38 = scmp.eq.s32.totalorder %s10, 1
      %p39 = por %p37, %p38
      %p40 = scmp.ne.s32.totalorder %s32, %s35
      %p41 = scmp.eq.s32.totalorder %s10, 0
      %p42 = por %p40, %p41
      %p43 = scmp.ne.s32.totalorder %s32, %s35
      %p44 = scmp.eq.s32.totalorder %s15, 1
      %p45 = por %p43, %p44
      %p46 = scmp.ne.s32.totalorder %s35, %s36
      %p47 = scmp.eq.s32.totalorder %s15, 0
      %p48 = por %p46, %p47
      %p49 = scmp.ne.s32.totalorder %s35, %s36
      %p50 = scmp.eq.s32.totalorder %s16, 1
      %p51 = por %p49, %p50
      %p53 = scmp.ne.s32.totalorder %s36, %s52
      %p54 = scmp.eq.s32.totalorder %s16, 0
      %p55 = por %p53, %p54
      %s56 = ssub.s32 %s17, %s29
      %s57 = ssub.s32 %s18, %s25
      %s58 = sor.u32 %s56, %s57
      %p59 = scmp.eq.s32.totalorder %s58, 0
      %s61 = sadd.s32 %s60, 1
      %s62 = scalar_select %p59, %s60, %s61
      %p65 = pneg %p59
      %p66 = scmp.eq.s32.totalorder %s10, 1
      %p67 = por %p65, %p66
      %p68 = scmp.ne.s32.totalorder %s60, %s63
      %p69 = scmp.eq.s32.totalorder %s10, 0
      %p70 = por %p68, %p69
      %p71 = scmp.ne.s32.totalorder %s60, %s63
      %p72 = scmp.eq.s32.totalorder %s15, 1
      %p73 = por %p71, %p72
      %p74 = scmp.ne.s32.totalorder %s63, %s64
      %p75 = scmp.eq.s32.totalorder %s15, 0
      %p76 = por %p74, %p75
      %p77 = scmp.ne.s32.totalorder %s63, %s64
      %p78 = scmp.eq.s32.totalorder %s16, 1
      %p79 = por %p77, %p78
      %p81 = scmp.ne.s32.totalorder %s64, %s80
      %p82 = scmp.eq.s32.totalorder %s16, 0
      %p83 = por %p81, %p82
      %p84 = scmp.le.s32.totalorder 1, %s10
      %p85 = scmp.lt.s32.totalorder %s10, 3
      %p86 = pnand %p84, %p85
      %p87 = pneg %p86
      // Predicated region
      $region9: #{fmnet_forward.1} parent=5 // pred_check
        _
      $region10: #{fmnet_forward.1} parent=5 // pred_check_branch
        %89 = sbr.rel (%p86) target = $region12
      $region11: #{fmnet_forward.1} parent=5 // pred_region
        %s90 = ssub.s32 %s10, 1
      $region12: #{fmnet_forward.1} parent=5 // pred_fallthru
        _
      %p91 = scmp.lt.s32.totalorder %s10, 2
      // Predicated region
      $region13: #{fmnet_forward.1} parent=5 // pred_check
        %p92 = pneg %p91
      $region14: #{fmnet_forward.1} parent=5 // pred_check_branch
        %94 = sbr.rel (%p92) target = $region16
      $region15: #{fmnet_forward.1} parent=5 // pred_region
        // Predicated region
        $region17: #{fmnet_forward.1} parent=15 // pred_check
          %p95 = pneg %p42
        $region18: #{fmnet_forward.1} parent=15 // pred_check_branch
          %97 = sbr.rel (%p95) target = $region20
        $region19: #{fmnet_forward.1} parent=15 // pred_region
          %p98 = scmp.lt.s32.totalorder %s17, 1
          %s99 = scalar_select %p98, %s17, 1
          %s100 = smul.addr %s99, 16
          %s101 = smul.addr %s100, 8
          %s102 = scalar_lea.vmem %s0, %s101
        $region20: #{fmnet_forward.1} parent=15 // pred_fallthru
          _
      $region16: #{fmnet_forward.1} parent=5 // pred_fallthru
        _
      %p103 = scmp.le.s32.totalorder 1, %s10
      %p104 = scmp.lt.s32.totalorder %s10, 3
      %p105 = pnand %p103, %p104
      %p106 = pneg %p105
      // Predicated region
      $region21: #{fmnet_forward.1} parent=5 // pred_check
        _
      $region22: #{fmnet_forward.1} parent=5 // pred_check_branch
        %108 = sbr.rel (%p105) target = $region24
      $region23: #{fmnet_forward.1} parent=5 // pred_region
        %s109 = ssub.s32 %s10, 1
        %p110 = scmp.lt.s32.totalorder %s19, 1
        %s111 = scalar_select %p110, %s19, 1
        %s112 = smul.addr %s111, 16
        %s113 = smul.addr %s112, 8
        %s114 = scalar_lea.vmem %s0, %s113
        %p115 = pneg %p48
        %p116 = pneg %p45
        %p117 = pneg %p76
        %p118 = pneg %p73
        %s119 = sand.u32 %s63, 1
        %s120 = scalar_lea.sflag [#allocation3], %s119
        %s121 = sand.u32 %s63, 1
        %s122 = smul.addr %s121, 512
        %s123 = scalar_lea.vmem [#allocation2], %s122
        %p124 = scmp.lt.s32.totalorder %s19, 1
        %s125 = scalar_select %p124, %s19, 1
        %s126 = smul.addr %s125, 16
        %s127 = smul.addr %s126, 8
        %s128 = scalar_lea.vmem %s0, %s127
        %s129 = smul.u32 32, %s20
        %v130 = vld [vmem:[%s128] sm:$0xff]
        %v131 = vld [vmem:[%s128 + $0x8] sm:$0xff]
        %v132 = vld [vmem:[%s128 + $0x10] sm:$0xff]
        %v133 = vld [vmem:[%s128 + $0x18] sm:$0xff]
        %v134 = vld [vmem:[%s128 + $0x20] sm:$0xff]
        %v135 = vld [vmem:[%s128 + $0x28] sm:$0xff]
        %v136 = vld [vmem:[%s128 + $0x30] sm:$0xff]
        %v137 = vld [vmem:[%s128 + $0x38] sm:$0xff]
        %v138 = vld [vmem:[%s128 + $0x40] sm:$0xff]
        %v139 = vld [vmem:[%s128 + $0x48] sm:$0xff]
        %v140 = vld [vmem:[%s128 + $0x50] sm:$0xff]
        %v141 = vld [vmem:[%s128 + $0x58] sm:$0xff]
        %v142 = vld [vmem:[%s128 + $0x60] sm:$0xff]
        %v143 = vld [vmem:[%s128 + $0x68] sm:$0xff]
        %v144 = vld [vmem:[%s128 + $0x70] sm:$0xff]
        %v145 = vld [vmem:[%s128 + $0x78] sm:$0xff]
        %v146 = vsub.f32 0.0, %v130
        %v147 = vsub.f32 0.0, %v131
        %v148 = vsub.f32 0.0, %v132
        %v149 = vsub.f32 0.0, %v133
        %v150 = vsub.f32 0.0, %v134
        %v151 = vsub.f32 0.0, %v135
        %v152 = vsub.f32 0.0, %v136
        %v153 = vsub.f32 0.0, %v137
        %v154 = vsub.f32 0.0, %v138
        %v155 = vsub.f32 0.0, %v139
        %v156 = vsub.f32 0.0, %v140
        %v157 = vsub.f32 0.0, %v141
        %v158 = vsub.f32 0.0, %v142
        %v159 = vsub.f32 0.0, %v143
        %v160 = vsub.f32 0.0, %v144
        %v161 = vsub.f32 0.0, %v145
        %v162 = vmul.f32 %v146, 1.442695
        %v163 = vpow.pop %v162
        %v164 = vmul.f32 %v147, 1.442695
        %v165 = vpow.pop %v164
        %v166 = vmul.f32 %v148, 1.442695
        %v167 = vpow.pop %v166
        %v168 = vmul.f32 %v149, 1.442695
        %v169 = vpow.pop %v168
        %v170 = vmul.f32 %v150, 1.442695
        %v171 = vpow.pop %v170
        %v172 = vmul.f32 %v151, 1.442695
        %v173 = vpow.pop %v172
        %v174 = vmul.f32 %v152, 1.442695
        %v175 = vpow.pop %v174
        %v176 = vmul.f32 %v153, 1.442695
        %v177 = vpow.pop %v176
        %v178 = vmul.f32 %v154, 1.442695
        %v179 = vpow.pop %v178
        %v180 = vmul.f32 %v155, 1.442695
        %v181 = vpow.pop %v180
        %v182 = vmul.f32 %v156, 1.442695
        %v183 = vpow.pop %v182
        %v184 = vmul.f32 %v157, 1.442695
        %v185 = vpow.pop %v184
        %v186 = vmul.f32 %v158, 1.442695
        %v187 = vpow.pop %v186
        %v188 = vmul.f32 %v159, 1.442695
        %v189 = vpow.pop %v188
        %v190 = vmul.f32 %v160, 1.442695
        %v191 = vpow.pop %v190
        %v192 = vmul.f32 %v161, 1.442695
        %v193 = vpow.pop %v192
        %v194 = vadd.f32 %v163, 1.0
        %v195 = vadd.f32 %v165, 1.0
        %v196 = vadd.f32 %v167, 1.0
        %v197 = vadd.f32 %v169, 1.0
        %v198 = vadd.f32 %v171, 1.0
        %v199 = vadd.f32 %v173, 1.0
        %v200 = vadd.f32 %v175, 1.0
        %v201 = vadd.f32 %v177, 1.0
        %v202 = vadd.f32 %v179, 1.0
        %v203 = vadd.f32 %v181, 1.0
        %v204 = vadd.f32 %v183, 1.0
        %v205 = vadd.f32 %v185, 1.0
        %v206 = vadd.f32 %v187, 1.0
        %v207 = vadd.f32 %v189, 1.0
        %v208 = vadd.f32 %v191, 1.0
        %v209 = vadd.f32 %v193, 1.0
        %v210 = vrcp.pop %v194
        %v211 = vmul.f32 1.0, %v210
        %v212 = vrcp.pop %v195
        %v213 = vmul.f32 1.0, %v212
        %v214 = vrcp.pop %v196
        %v215 = vmul.f32 1.0, %v214
        %v216 = vrcp.pop %v197
        %v217 = vmul.f32 1.0, %v216
        %v218 = vrcp.pop %v198
        %v219 = vmul.f32 1.0, %v218
        %v220 = vrcp.pop %v199
        %v221 = vmul.f32 1.0, %v220
        %v222 = vrcp.pop %v200
        %v223 = vmul.f32 1.0, %v222
        %v224 = vrcp.pop %v201
        %v225 = vmul.f32 1.0, %v224
        %v226 = vrcp.pop %v202
        %v227 = vmul.f32 1.0, %v226
        %v228 = vrcp.pop %v203
        %v229 = vmul.f32 1.0, %v228
        %v230 = vrcp.pop %v204
        %v231 = vmul.f32 1.0, %v230
        %v232 = vrcp.pop %v205
        %v233 = vmul.f32 1.0, %v232
        %v234 = vrcp.pop %v206
        %v235 = vmul.f32 1.0, %v234
        %v236 = vrcp.pop %v207
        %v237 = vmul.f32 1.0, %v236
        %v238 = vrcp.pop %v208
        %v239 = vmul.f32 1.0, %v238
        %v240 = vrcp.pop %v209
        %v241 = vmul.f32 1.0, %v240
        %242 = vst [vmem:[%s123] sm:$0xff] %v211
        %243 = vst [vmem:[%s123 + $0x10] sm:$0xff] %v213
        %244 = vst [vmem:[%s123 + $0x20] sm:$0xff] %v215
        %245 = vst [vmem:[%s123 + $0x30] sm:$0xff] %v217
        %246 = vst [vmem:[%s123 + $0x40] sm:$0xff] %v219
        %247 = vst [vmem:[%s123 + $0x50] sm:$0xff] %v221
        %248 = vst [vmem:[%s123 + $0x60] sm:$0xff] %v223
        %249 = vst [vmem:[%s123 + $0x70] sm:$0xff] %v225
        %250 = vst [vmem:[%s123 + $0x80] sm:$0xff] %v227
        %251 = vst [vmem:[%s123 + $0x90] sm:$0xff] %v229
        %252 = vst [vmem:[%s123 + $0xa0] sm:$0xff] %v231
        %253 = vst [vmem:[%s123 + $0xb0] sm:$0xff] %v233
        %254 = vst [vmem:[%s123 + $0xc0] sm:$0xff] %v235
        %255 = vst [vmem:[%s123 + $0xd0] sm:$0xff] %v237
        %256 = vst [vmem:[%s123 + $0xe0] sm:$0xff] %v239
        %257 = vst [vmem:[%s123 + $0xf0] sm:$0xff] %v241
        %258 = vst [vmem:[%s123 + $0x8] sm:$0xff] 0.0
        %259 = vst [vmem:[%s123 + $0x18] sm:$0xff] 0.0
        %260 = vst [vmem:[%s123 + $0x28] sm:$0xff] 0.0
        %261 = vst [vmem:[%s123 + $0x38] sm:$0xff] 0.0
        %262 = vst [vmem:[%s123 + $0x48] sm:$0xff] 0.0
        %263 = vst [vmem:[%s123 + $0x58] sm:$0xff] 0.0
        %264 = vst [vmem:[%s123 + $0x68] sm:$0xff] 0.0
        %265 = vst [vmem:[%s123 + $0x78] sm:$0xff] 0.0
        %266 = vst [vmem:[%s123 + $0x88] sm:$0xff] 0.0
        %267 = vst [vmem:[%s123 + $0x98] sm:$0xff] 0.0
        %268 = vst [vmem:[%s123 + $0xa8] sm:$0xff] 0.0
        %269 = vst [vmem:[%s123 + $0xb8] sm:$0xff] 0.0
        %270 = vst [vmem:[%s123 + $0xc8] sm:$0xff] 0.0
        %271 = vst [vmem:[%s123 + $0xd8] sm:$0xff] 0.0
        %272 = vst [vmem:[%s123 + $0xe8] sm:$0xff] 0.0
        %273 = vst [vmem:[%s123 + $0xf8] sm:$0xff] 0.0
        %274 = vst [vmem:[%s123 + $0x100] sm:$0xff] 0.0
        %275 = vst [vmem:[%s123 + $0x108] sm:$0xff] 0.0
        %276 = vst [vmem:[%s123 + $0x110] sm:$0xff] 0.0
        %277 = vst [vmem:[%s123 + $0x118] sm:$0xff] 0.0
        %278 = vst [vmem:[%s123 + $0x120] sm:$0xff] 0.0
        %279 = vst [vmem:[%s123 + $0x128] sm:$0xff] 0.0
        %280 = vst [vmem:[%s123 + $0x130] sm:$0xff] 0.0
        %281 = vst [vmem:[%s123 + $0x138] sm:$0xff] 0.0
        %282 = vst [vmem:[%s123 + $0x140] sm:$0xff] 0.0
        %283 = vst [vmem:[%s123 + $0x148] sm:$0xff] 0.0
        %284 = vst [vmem:[%s123 + $0x150] sm:$0xff] 0.0
        %285 = vst [vmem:[%s123 + $0x158] sm:$0xff] 0.0
        %286 = vst [vmem:[%s123 + $0x160] sm:$0xff] 0.0
        %287 = vst [vmem:[%s123 + $0x168] sm:$0xff] 0.0
        %288 = vst [vmem:[%s123 + $0x170] sm:$0xff] 0.0
        %289 = vst [vmem:[%s123 + $0x178] sm:$0xff] 0.0
        %290 = vst [vmem:[%s123 + $0x180] sm:$0xff] 0.0
        %291 = vst [vmem:[%s123 + $0x188] sm:$0xff] 0.0
        %292 = vst [vmem:[%s123 + $0x190] sm:$0xff] 0.0
        %293 = vst [vmem:[%s123 + $0x198] sm:$0xff] 0.0
        %294 = vst [vmem:[%s123 + $0x1a0] sm:$0xff] 0.0
        %295 = vst [vmem:[%s123 + $0x1a8] sm:$0xff] 0.0
        %296 = vst [vmem:[%s123 + $0x1b0] sm:$0xff] 0.0
        %297 = vst [vmem:[%s123 + $0x1b8] sm:$0xff] 0.0
        %298 = vst [vmem:[%s123 + $0x1c0] sm:$0xff] 0.0
        %299 = vst [vmem:[%s123 + $0x1c8] sm:$0xff] 0.0
        %300 = vst [vmem:[%s123 + $0x1d0] sm:$0xff] 0.0
        %301 = vst [vmem:[%s123 + $0x1d8] sm:$0xff] 0.0
        %302 = vst [vmem:[%s123 + $0x1e0] sm:$0xff] 0.0
        %303 = vst [vmem:[%s123 + $0x1e8] sm:$0xff] 0.0
        %304 = vst [vmem:[%s123 + $0x1f0] sm:$0xff] 0.0
        %305 = vst [vmem:[%s123 + $0x1f8] sm:$0xff] 0.0
        %s306 = sand.u32 %s63, 1
        %s307 = scalar_lea.sflag [#allocation3], %s306
        %s308 = sand.u32 %s63, 1
        %s309 = smul.addr %s308, 512
        %s310 = scalar_lea.vmem [#allocation2], %s309
        // Predicated region
        $region25: #{fmnet_forward.1} parent=23 // pred_check
          %p311 = pneg %p73
        $region26: #{fmnet_forward.1} parent=23 // pred_check_branch
          %313 = sbr.rel (%p311) target = $region28
        $region27: #{fmnet_forward.1} parent=23 // pred_region
          %s314 = smul.u32 32, %s20
          %s316 = ssub.s32 8192, 8192
          %317 = vsyncadd %s307, %s316
          %s318 = smul.addr %s314, 2
          %s319 = smul.addr %s19, 64
          %s320 = sadd.s32 %s318, %s319
          %s321 = smul.addr %s320, 128
          %s322 = scalar_lea.hbm %s1, %s321
          %s323 = sshll.u32 %s310, 4
          %s324 = int_to_ptr.vmem [resolvable:$true] %s323
          %329 = dma.vmem_to_hbm [thread:$0]  %s324, 8192, %s322, %s307, 256, 256, 16
        $region28: #{fmnet_forward.1} parent=23 // pred_fallthru
          _
      $region24: #{fmnet_forward.1} parent=5 // pred_fallthru
        _
      %p330 = scmp.le.s32.totalorder 2, %s10
      // Predicated region
      $region29: #{fmnet_forward.1} parent=5 // pred_check
        %p331 = pneg %p330
      $region30: #{fmnet_forward.1} parent=5 // pred_check_branch
        %333 = sbr.rel (%p331) target = $region32
      $region31: #{fmnet_forward.1} parent=5 // pred_region
        %s334 = ssub.s32 %s10, 2
        // Predicated region
        $region33: #{fmnet_forward.1} parent=31 // pred_check
          %p335 = pneg %p79
        $region34: #{fmnet_forward.1} parent=31 // pred_check_branch
          %337 = sbr.rel (%p335) target = $region36
        $region35: #{fmnet_forward.1} parent=31 // pred_region
          %s338 = sand.u32 %s64, 1
          %s339 = scalar_lea.sflag [#allocation3], %s338
          %s340 = sand.u32 %s64, 1
          %s341 = smul.addr %s340, 512
          %s342 = scalar_lea.vmem [#allocation2], %s341
          %343 = dma.done %s339, 8192
        $region36: #{fmnet_forward.1} parent=31 // pred_fallthru
          _
      $region32: #{fmnet_forward.1} parent=5 // pred_fallthru
        _
    $region6: #{fmnet_forward.1} parent=1 // loop_footer
      %s14 = sadd.s32 1, %s10
    $region7: #{fmnet_forward.1} parent=1 // loop_footer_branch
      %9 = sbr.rel target = $region3
    $region8: #{fmnet_forward.1} parent=1 // loop_exit
      _
    %344 = vsyncpa [#allocation3], 1
    %s345 = scalar_lea.sflag [#allocation3], 1
    %346 = vsyncpa %s345, 1

</llo_original>
